<compile_context>
chip_gen: v6e
topology: v6e:2x2x1
jax: 0.10.0
libtpu: 0.0.40
codegen_flags: <defaults>
</compile_context>

<pallas_src>
import functools

import jax
import jax.numpy as jnp
from jax.experimental import pallas as pl
from jax.experimental.pallas import tpu as pltpu

LANE = 128


def _round_up(v, m):
    return (v + m - 1) // m * m


# ----------------------------------------------------------------------------
# Kernel 1: upconv GEMM   Y = X @ Wt + bt   (rows tiled, lane-dense 4*Cop output)
# ----------------------------------------------------------------------------
def _upconv_kernel(x_ref, w_ref, b_ref, o_ref):
    acc = jnp.dot(x_ref[...], w_ref[...], preferred_element_type=jnp.float32)
    acc = acc + b_ref[...]
    o_ref[...] = acc.astype(o_ref.dtype)


def _upconv_gemm(x_flat, w_mat, b_vec, out_dtype, row_tile=512):
    M, K = x_flat.shape
    _, Nc = w_mat.shape
    tm = _round_up(min(row_tile, _round_up(M, 8)), 8)
    Mp = _round_up(M, tm)
    if Mp != M:  # pad rows instead of collapsing the grid to one giant block
        x_flat = jnp.pad(x_flat, ((0, Mp - M), (0, 0)))
    out = pl.pallas_call(
        _upconv_kernel,
        out_shape=jax.ShapeDtypeStruct((Mp, Nc), out_dtype),
        grid=(Mp // tm,),
        in_specs=[
            pl.BlockSpec((tm, K), lambda i: (i, 0)),
            pl.BlockSpec((K, Nc), lambda i: (0, 0)),
            pl.BlockSpec((1, Nc), lambda i: (0, 0)),
        ],
        out_specs=pl.BlockSpec((tm, Nc), lambda i: (i, 0)),
        compiler_params=pltpu.CompilerParams(
            dimension_semantics=("parallel",),
            vmem_limit_bytes=32 * 1024 * 1024),
    )(x_flat, w_mat, b_vec)
    return out[:M]


# ----------------------------------------------------------------------------
# Kernel 2: fused conv1(3x3)+ReLU -> conv2(3x3)+ReLU over one row tile.
# Inputs are the zero-padded NHWC `previousX` and upconv output; the "cat" is
# never formed in HBM: conv1 accumulates the two channel halves separately.
# ----------------------------------------------------------------------------
def _dec_conv_kernel(pc_ref, pt_ref, pb_ref, uc_ref, ut_ref, ub_ref,
                     w1a_ref, w1b_ref, w2_ref, b1_ref, b2_ref,
                     o_ref, sA, sB, hbuf,
                     *, TR, WO, HO, Cpp, Cop, cdtype):
    t = pl.program_id(1)

    # Assemble the (TR+4)-row input slabs (2-row halo above and below).
    sA[0:2, :, :] = pt_ref[0]
    sA[2:2 + TR, :, :] = pc_ref[0]
    sA[2 + TR:4 + TR, :, :] = pb_ref[0]
    sB[0:2, :, :] = ut_ref[0]
    sB[2:2 + TR, :, :] = uc_ref[0]
    sB[2 + TR:4 + TR, :, :] = ub_ref[0]

    f32 = jnp.float32

    # ---- conv1: 3x3 over cat([prev, up]) as 18 accumulated GEMMs (no im2col) ----
    acc = jnp.zeros(((TR + 2) * WO, Cop), f32)
    for ky in range(3):
        for kx in range(3):
            k = ky * 3 + kx
            a = sA[ky:ky + TR + 2, kx:kx + WO, :].reshape((TR + 2) * WO, Cpp)
            acc = acc + jnp.dot(a, w1a_ref[k], preferred_element_type=f32)
            b = sB[ky:ky + TR + 2, kx:kx + WO, :].reshape((TR + 2) * WO, Cop)
            acc = acc + jnp.dot(b, w1b_ref[k], preferred_element_type=f32)
    h = jnp.maximum(acc + b1_ref[...], 0.0).reshape(TR + 2, WO, Cop)

    # Rows of h outside the valid image are conv2's zero padding -> mask them.
    gh = t * TR - 1 + jax.lax.broadcasted_iota(jnp.int32, (TR + 2, 1, 1), 0)
    h = jnp.where((gh >= 0) & (gh < HO), h, 0.0).astype(cdtype)

    # Keep h in VMEM (never round-trips HBM); zero width borders for conv2.
    hbuf[:, 0:1, :] = jnp.zeros((TR + 2, 1, Cop), cdtype)
    hbuf[:, WO + 1:WO + 2, :] = jnp.zeros((TR + 2, 1, Cop), cdtype)
    hbuf[:, 1:WO + 1, :] = h

    # ---- conv2: 3x3 over h as 9 accumulated GEMMs ----
    acc2 = jnp.zeros((TR * WO, Cop), f32)
    for ky in range(3):
        for kx in range(3):
            k = ky * 3 + kx
            a = hbuf[ky:ky + TR, kx:kx + WO, :].reshape(TR * WO, Cop)
            acc2 = acc2 + jnp.dot(a, w2_ref[k], preferred_element_type=f32)
    out = jnp.maximum(acc2 + b2_ref[...], 0.0)
    o_ref[...] = out.reshape(1, TR, WO, Cop).astype(o_ref.dtype)


def _choose_row_tile(HO, WO, Cpp, Cop, itemsize, budget=12 * 2**20):
    """Largest even row tile whose per-step VMEM footprint fits the budget."""
    weights = 2 * 9 * (Cpp + 2 * Cop) * Cop * itemsize
    best = 2
    tr = 2
    cap = min(max(2, _round_up(HO, 2)), 256)
    while tr <= cap:
        slabs = (2 * (tr + 4) + (tr + 2)) * (WO + 2) * max(Cpp, Cop) * itemsize
        inblk = 2 * (tr + 4) * (WO + 2) * (Cpp + Cop) * itemsize   # double-buffered
        outblk = 2 * tr * WO * Cop * 4
        accs = (2 * tr + 2) * WO * Cop * 4
        if weights + slabs + inblk + outblk + accs <= budget:
            best = tr
        tr += 2
    return best


# ----------------------------------------------------------------------------
# ExtractPath forward (NHWC core; NCHW wrapper below for PyTorch parity).
# ----------------------------------------------------------------------------
def extract_path_forward_nhwc(prev_nhwc, x_nhwc, params, *,
                              compute_dtype=jnp.float32, row_tile=None):
    N, HO, WO, Cprev = prev_nhwc.shape
    Nx, H, W, Cin = x_nhwc.shape
    assert Nx == N and HO == 2 * H and WO == 2 * W
    wt, bt = params["wt"], params["bt"]
    w1, b1 = params["w1"], params["b1"]
    w2, b2 = params["w2"], params["b2"]
    outC = wt.shape[1]
    assert wt.shape == (Cin, outC, 2, 2)
    assert w1.shape[0] == outC and w1.shape[1] == Cprev + outC  # cat([prev, up])
    assert w2.shape == (outC, outC, 3, 3)

    cdt = compute_dtype
    itemsize = jnp.dtype(cdt).itemsize
    Cip = _round_up(Cin, LANE)     # lane-dense / MXU-aligned channel padding
    Cpp = _round_up(Cprev, LANE)
    Cop = _round_up(outC, LANE)

    # ----- upConv: ConvTranspose2d(Cin, outC, k=2, s=2) as one tiled GEMM -----
    wt_mat = jnp.transpose(wt, (0, 2, 3, 1))                     # (Cin, 2, 2, outC)
    wt_mat = jnp.pad(wt_mat, ((0, Cip - Cin), (0, 0), (0, 0), (0, Cop - outC)))
    wt_mat = wt_mat.reshape(Cip, 4 * Cop).astype(cdt)            # cols = (di, dj, c)
    bt_vec = jnp.tile(jnp.pad(bt, (0, Cop - outC)), 4).reshape(1, 4 * Cop)
    bt_vec = bt_vec.astype(jnp.float32)
    x_p = jnp.pad(x_nhwc, ((0, 0), (0, 0), (0, 0), (0, Cip - Cin))).astype(cdt)
    up_flat = _upconv_gemm(x_p.reshape(N * H * W, Cip), wt_mat, bt_vec, cdt)
    # 2x2 pixel-shuffle of the transposed conv (single XLA pass over `up`).
    # TODO(synk): fold this interleave into the fused kernel to remove the last
    # HBM round trip of `up`.
    up = (up_flat.reshape(N, H, W, 2, 2, Cop)
          .transpose(0, 1, 3, 2, 4, 5)
          .reshape(N, HO, WO, Cop))

    # ----- fused conv1+conv2 over row tiles -----
    TR = row_tile if row_tile is not None else _choose_row_tile(HO, WO, Cpp, Cop, itemsize)
    TR = max(2, TR + (TR % 2))          # even row tile (2-row halo blocks)
    Tn = pl.cdiv(HO, TR)
    RP = (Tn + 2) * TR                  # padded rows: TR zeros on top, rest at bottom
    prev_p = jnp.pad(prev_nhwc.astype(cdt),
                     ((0, 0), (TR, RP - TR - HO), (1, 1), (0, Cpp - Cprev)))
    up_p = jnp.pad(up, ((0, 0), (TR, RP - TR - HO), (1, 1), (0, 0)))

    def conv_w(w, cin, cin_p):
        wm = jnp.transpose(w, (2, 3, 1, 0))                      # (3, 3, cin, outC)
        wm = jnp.pad(wm, ((0, 0), (0, 0), (0, cin_p - cin), (0, Cop - outC)))
        return wm.reshape(9, cin_p, Cop).astype(cdt)

    w1a = conv_w(w1[:, :Cprev], Cprev, Cpp)   # conv1, previousX channel half
    w1b = conv_w(w1[:, Cprev:], outC, Cop)    # conv1, upconv channel half
    w2m = conv_w(w2, outC, Cop)
    b1v = jnp.pad(b1, (0, Cop - outC)).reshape(1, Cop).astype(jnp.float32)
    b2v = jnp.pad(b2, (0, Cop - outC)).reshape(1, Cop).astype(jnp.float32)

    kern = functools.partial(_dec_conv_kernel, TR=TR, WO=WO, HO=HO,
                             Cpp=Cpp, Cop=Cop, cdtype=cdt)
    half = TR // 2
    out = pl.pallas_call(
        kern,
        out_shape=jax.ShapeDtypeStruct((N, Tn * TR, WO, Cop), jnp.float32),
        grid=(N, Tn),
        in_specs=[
            # previousX: center tile + 2-row top/bottom halo slivers (auto-pipelined)
            pl.BlockSpec((1, TR, WO + 2, Cpp), lambda n, t: (n, t + 1, 0, 0)),
            pl.BlockSpec((1, 2, WO + 2, Cpp), lambda n, t: (n, (t + 1) * half - 1, 0, 0)),
            pl.BlockSpec((1, 2, WO + 2, Cpp), lambda n, t: (n, (t + 2) * half, 0, 0)),
            # upconv output: same three windows
            pl.BlockSpec((1, TR, WO + 2, Cop), lambda n, t: (n, t + 1, 0, 0)),
            pl.BlockSpec((1, 2, WO + 2, Cop), lambda n, t: (n, (t + 1) * half - 1, 0, 0)),
            pl.BlockSpec((1, 2, WO + 2, Cop), lambda n, t: (n, (t + 2) * half, 0, 0)),
            # weights / biases: resident (constant index map)
            pl.BlockSpec((9, Cpp, Cop), lambda n, t: (0, 0, 0)),
            pl.BlockSpec((9, Cop, Cop), lambda n, t: (0, 0, 0)),
            pl.BlockSpec((9, Cop, Cop), lambda n, t: (0, 0, 0)),
            pl.BlockSpec((1, Cop), lambda n, t: (0, 0)),
            pl.BlockSpec((1, Cop), lambda n, t: (0, 0)),
        ],
        out_specs=pl.BlockSpec((1, TR, WO, Cop), lambda n, t: (n, t, 0, 0)),
        scratch_shapes=[
            pltpu.VMEM((TR + 4, WO + 2, Cpp), cdt),   # previousX slab (with halo)
            pltpu.VMEM((TR + 4, WO + 2, Cop), cdt),   # upconv slab (with halo)
            pltpu.VMEM((TR + 2, WO + 2, Cop), cdt),   # conv1 output h (stays in VMEM)
        ],
        compiler_params=pltpu.CompilerParams(
            dimension_semantics=("parallel", "parallel"),
            vmem_limit_bytes=48 * 1024 * 1024),
    )(prev_p, prev_p, prev_p, up_p, up_p, up_p, w1a, w1b, w2m, b1v, b2v)
    return out[:, :HO, :, :outC]


def extract_path_forward(previous_x_nchw, x_nchw, params, **kw):
    # NCHW wrapper for PyTorch parity (prefer the NHWC entry point to avoid the
    # boundary transposes entirely).
    prev = jnp.transpose(previous_x_nchw, (0, 2, 3, 1))
    x = jnp.transpose(x_nchw, (0, 2, 3, 1))
    out = extract_path_forward_nhwc(prev, x, params, **kw)
    return jnp.transpose(out, (0, 3, 1, 2))


# ----------------------------------------------------------------------------
# Pure-JAX reference.
# ----------------------------------------------------------------------------
def extract_path_reference(previous_x_nchw, x_nchw, params):
    prev = jnp.transpose(previous_x_nchw, (0, 2, 3, 1))
    x = jnp.transpose(x_nchw, (0, 2, 3, 1))
    N, H, W, _ = x.shape
    outC = params["wt"].shape[1]
    up = jnp.einsum("nijc,coab->niajbo", x, params["wt"]).reshape(N, 2 * H, 2 * W, outC)
    up = up + params["bt"]
    cat = jnp.concatenate([prev, up], axis=-1)

    def conv(z, w, b):
        rhs = jnp.transpose(w, (2, 3, 1, 0))  # HWIO
        y = jax.lax.conv_general_dilated(
            z, rhs, (1, 1), "SAME", dimension_numbers=("NHWC", "HWIO", "NHWC"))
        return jax.nn.relu(y + b)

    out = conv(conv(cat, params["w1"], params["b1"]), params["w2"], params["b2"])
    return jnp.transpose(out, (0, 3, 1, 2))


if __name__ == "__main__":
    key = jax.random.PRNGKey(0)
    kpx, kx, k1, k2, k3, k4, k5, k6 = jax.random.split(key, 8)

    inC, outC = 8, 4
    N, H, W = 2, 8, 8   # x is (N, inC, H, W); previousX is the skip at 2x resolution

    previous_x = jax.random.normal(kpx, (N, outC, 2 * H, 2 * W), jnp.float32)
    x = jax.random.normal(kx, (N, inC, H, W), jnp.float32)

    params = dict(
        wt=jax.random.normal(k1, (inC, outC, 2, 2), jnp.float32) * 0.1,   # ConvTranspose2d
        bt=jax.random.normal(k2, (outC,), jnp.float32) * 0.1,
        w1=jax.random.normal(k3, (outC, inC, 3, 3), jnp.float32) * 0.1,   # Conv2d
        b1=jax.random.normal(k4, (outC,), jnp.float32) * 0.1,
        w2=jax.random.normal(k5, (outC, outC, 3, 3), jnp.float32) * 0.1,  # Conv2d
        b2=jax.random.normal(k6, (outC,), jnp.float32) * 0.1,
    )

    ref = extract_path_reference(previous_x, x, params)

    # f32, multiple row tiles (exercises halo assembly and edge masking).
    out = jax.block_until_ready(extract_path_forward(previous_x, x, params, row_tile=8))
    assert out.shape == (N, outC, 2 * H, 2 * W), out.shape
    assert jnp.allclose(out, ref, atol=1e-4, rtol=1e-4), float(jnp.max(jnp.abs(out - ref)))

    # f32, non-dividing row tile (exercises cdiv padding + masked boundary rows).
    out6 = jax.block_until_ready(extract_path_forward(previous_x, x, params, row_tile=6))
    assert jnp.allclose(out6, ref, atol=1e-4, rtol=1e-4), float(jnp.max(jnp.abs(out6 - ref)))

    # bf16 operands / f32 accumulation (v6e / v7x MXU path), auto row tile.
    outb = jax.block_until_ready(
        extract_path_forward(previous_x, x, params, compute_dtype=jnp.bfloat16))
    assert jnp.allclose(outb, ref, atol=5e-2, rtol=5e-2), float(jnp.max(jnp.abs(outb - ref)))

    print("KERNEL_OK")
</pallas_src>

<mosaic_0001>
module attributes {stable_mosaic.version = 11 : i64} {
  func.func @_upconv_kernel(%arg0: i32, %arg1: memref<128x128xf32, #tpu.memory_space<vmem>>, %arg2: memref<128x512xf32, #tpu.memory_space<vmem>>, %arg3: memref<1x512xf32, #tpu.memory_space<vmem>>, %arg4: memref<128x512xf32, #tpu.memory_space<vmem>>) attributes {dimension_semantics = [#tpu.dimension_semantics<parallel>], iteration_bounds = array<i64: 1>, scalar_prefetch = 0 : i64, scratch_operands = 0 : i64, tpu.core_type = #tpu.core_type<tc>, window_params = [{transform_indices = @transform_0, window_bounds = array<i64: 128, 128>}, {pipeline_mode = #tpu.pipeline_mode<synchronous>, transform_indices = @transform_1, window_bounds = array<i64: 128, 512>}, {pipeline_mode = #tpu.pipeline_mode<synchronous>, transform_indices = @transform_2, window_bounds = array<i64: 1, 512>}, {transform_indices = @transform_3, window_bounds = array<i64: 128, 512>}]} {
    %c0 = arith.constant 0 : index
    %c0_0 = arith.constant 0 : index
    %0 = vector.load %arg1[%c0, %c0_0] : memref<128x128xf32, #tpu.memory_space<vmem>>, vector<128x128xf32>
    %c0_1 = arith.constant 0 : index
    %c0_2 = arith.constant 0 : index
    %1 = vector.load %arg2[%c0_1, %c0_2] : memref<128x512xf32, #tpu.memory_space<vmem>>, vector<128x512xf32>
    %cst = arith.constant dense<0.000000e+00> : vector<128x512xf32>
    %2 = tpu.matmul %0, %1, %cst {dimension_numbers = #tpu.dot_dimension_numbers<[1], [0], [0], [1], [0, 0, 1, 1], [], []>} : vector<128x128xf32>, vector<128x512xf32>, vector<128x512xf32> -> vector<128x512xf32>
    %c0_3 = arith.constant 0 : index
    %c0_4 = arith.constant 0 : index
    %3 = vector.load %arg3[%c0_3, %c0_4] : memref<1x512xf32, #tpu.memory_space<vmem>>, vector<1x512xf32>
    %4 = vector.broadcast %3 : vector<1x512xf32> to vector<128x512xf32>
    %5 = arith.addf %2, %4 : vector<128x512xf32>
    %c0_5 = arith.constant 0 : index
    %c0_6 = arith.constant 0 : index
    %6 = vector.load %arg4[%c0_5, %c0_6] : memref<128x512xf32, #tpu.memory_space<vmem>>, vector<128x512xf32>
    tpu.vector_store %arg4[%c0_5, %c0_6], %5 {strides = array<i32>} : memref<128x512xf32, #tpu.memory_space<vmem>>, vector<128x512xf32>,
    return
  }
  func.func @transform_0(%arg0: i32) -> (i32, i32) {
    %c0_i32 = arith.constant 0 : i32
    %c0_i32_0 = arith.constant 0 : i32
    return %arg0, %c0_i32 : i32, i32
  }
  func.func @transform_1(%arg0: i32) -> (i32, i32) {
    %c0_i32 = arith.constant 0 : i32
    %c0_i32_0 = arith.constant 0 : i32
    %c0_i32_1 = arith.constant 0 : i32
    return %c0_i32, %c0_i32_0 : i32, i32
  }
  func.func @transform_2(%arg0: i32) -> (i32, i32) {
    %c0_i32 = arith.constant 0 : i32
    %c0_i32_0 = arith.constant 0 : i32
    %c0_i32_1 = arith.constant 0 : i32
    return %c0_i32, %c0_i32_0 : i32, i32
  }
  func.func @transform_3(%arg0: i32) -> (i32, i32) {
    %c0_i32 = arith.constant 0 : i32
    %c0_i32_0 = arith.constant 0 : i32
    return %arg0, %c0_i32 : i32, i32
  }
}

</mosaic_0001>

<llo_original>
// kernel: tpu_custom_call.1
$region0: #{tpu_custom_call.1}
  #allocation0 [shape = 'u32[]', space=smem, size = 0x4, offset = 0x4, fixed_abs, tag = 'smem constant byte address 0x4 - core index']
  #allocation1 [shape = 'u32[144,128]{1,0:T(1,128)}', space=vmem, size = 0x12000, scoped, tag = 'internal scratch']
  %s0 = inlined_call_operand.hbm [shape: f32[128,128], index: 0, kind: input, shape index: {}]
  %s1 = inlined_call_operand.hbm [shape: f32[128,512], index: 1, kind: input, shape index: {}]
  %s2 = inlined_call_operand.hbm [shape: f32[1,512], index: 2, kind: input, shape index: {}]
  %s3 = inlined_call_operand.hbm [shape: f32[128,512], index: 3, kind: output, shape index: {}]
  %s4 = sld [smem:[#allocation0]]
  $region34: #{tpu_custom_call.1} parent=0
    _
  %s6 = ssub.s32 1, %s4
  %s7 = scalar_select 0, %s6, %s4
  $region1: #{tpu_custom_call.1} parent=0
    #allocation2 [shape = 'u8[65536]{0}', space=vmem, size = 0x10000, scoped, tag = 'input window, operand 0, single buffered']
    #allocation3 [shape = 's32[1]{0}', space=sflag, size = 0x4, scoped, tag = 'scoped memory for tpu_custom_call.1']
    #allocation4 [shape = 's32[1]{0}', space=sflag, size = 0x4, scoped, tag = 'scoped memory for tpu_custom_call.1']
    #allocation5 [shape = 'u8[262144]{0}', space=vmem, size = 0x40000, scoped, tag = 'input window, operand 1, single buffered']
    #allocation6 [shape = 's32[1]{0}', space=sflag, size = 0x4, scoped, tag = 'scoped memory for tpu_custom_call.1']
    #allocation7 [shape = 'u8[2048]{0}', space=vmem, size = 0x800, scoped, tag = 'input window, operand 2, single buffered']
    #allocation8 [shape = 'u8[262144]{0}', space=vmem, size = 0x40000, scoped, tag = 'output window, operand 0, single buffered']
    %8 = vsyncpa [#allocation3], 0
    %9 = vsyncpa [#allocation6], 0
    %10 = vsyncpa [#allocation4], 0
    // Predicated region
    $region2: #{tpu_custom_call.1} parent=1 // pred_check
      _
    $region3: #{tpu_custom_call.1} parent=1 // pred_check_branch
      %12 = sbr.rel (0) target = $region5
    $region4: #{tpu_custom_call.1} parent=1 // pred_region
      %s14 = ssub.s32 2048, 2048
      %15 = vsyncadd [#allocation3], %s14
      %s16 = sshll.u32 [#allocation2], 4
      %s17 = int_to_ptr.vmem [resolvable:$true] %s16
      %22 = dma.hbm_to_vmem [thread:$0]  %s0, 2048, %s17, [#allocation3], 128, 128, 8
    $region5: #{tpu_custom_call.1} parent=1 // pred_fallthru
      _
    // Predicated region
    $region6: #{tpu_custom_call.1} parent=1 // pred_check
      _
    $region7: #{tpu_custom_call.1} parent=1 // pred_check_branch
      %24 = sbr.rel (0) target = $region9
    $region8: #{tpu_custom_call.1} parent=1 // pred_region
      %s26 = ssub.s32 8192, 8192
      %27 = vsyncadd [#allocation6], %s26
      %s28 = sshll.u32 [#allocation5], 4
      %s29 = int_to_ptr.vmem [resolvable:$true] %s28
      %34 = dma.hbm_to_vmem [thread:$0]  %s1, 8192, %s29, [#allocation6], 512, 512, 32
    $region9: #{tpu_custom_call.1} parent=1 // pred_fallthru
      _
    // Predicated region
    $region10: #{tpu_custom_call.1} parent=1 // pred_check
      _
    $region11: #{tpu_custom_call.1} parent=1 // pred_check_branch
      %36 = sbr.rel (0) target = $region13
    $region12: #{tpu_custom_call.1} parent=1 // pred_region
      %s38 = ssub.s32 64, 64
      %39 = vsyncadd [#allocation6], %s38
      %s41 = sshll.u32 [#allocation7], 4
      %s42 = int_to_ptr.vmem [resolvable:$true] %s41
      %44 = dma.hbm_to_vmem [thread:$0]  %s2, 64, %s42, [#allocation6]
    $region13: #{tpu_custom_call.1} parent=1 // pred_fallthru
      _
    // Predicated region
    $region14: #{tpu_custom_call.1} parent=1 // pred_check
      _
    $region15: #{tpu_custom_call.1} parent=1 // pred_check_branch
      %46 = sbr.rel (0) target = $region17
    $region16: #{tpu_custom_call.1} parent=1 // pred_region
      %47 = dma.done [#allocation3], 2048
    $region17: #{tpu_custom_call.1} parent=1 // pred_fallthru
      _
    // Predicated region
    $region18: #{tpu_custom_call.1} parent=1 // pred_check
      _
    $region19: #{tpu_custom_call.1} parent=1 // pred_check_branch
      %49 = sbr.rel (0) target = $region21
    $region20: #{tpu_custom_call.1} parent=1 // pred_region
      %50 = dma.done [#allocation6], 8192
    $region21: #{tpu_custom_call.1} parent=1 // pred_fallthru
      _
    // Predicated region
    $region22: #{tpu_custom_call.1} parent=1 // pred_check
      _
    $region23: #{tpu_custom_call.1} parent=1 // pred_check_branch
      %52 = sbr.rel (0) target = $region25
    $region24: #{tpu_custom_call.1} parent=1 // pred_region
      %53 = dma.done [#allocation6], 64
    $region25: #{tpu_custom_call.1} parent=1 // pred_fallthru
      _
    %v54 = vld [vmem:[#allocation2] sm:$0xff]
    %v55 = vld [vmem:[#allocation2 + $0x8] sm:$0xff]
    %v56 = vld [vmem:[#allocation2 + $0x10] sm:$0xff]
    %v57 = vld [vmem:[#allocation2 + $0x18] sm:$0xff]
    %v58 = vld [vmem:[#allocation2 + $0x20] sm:$0xff]
    %v59 = vld [vmem:[#allocation2 + $0x28] sm:$0xff]
    %v60 = vld [vmem:[#allocation2 + $0x30] sm:$0xff]
    %v61 = vld [vmem:[#allocation2 + $0x38] sm:$0xff]
    %v62 = vld [vmem:[#allocation2 + $0x40] sm:$0xff]
    %v63 = vld [vmem:[#allocation2 + $0x48] sm:$0xff]
    %v64 = vld [vmem:[#allocation2 + $0x50] sm:$0xff]
    %v65 = vld [vmem:[#allocation2 + $0x58] sm:$0xff]
    %v66 = vld [vmem:[#allocation2 + $0x60] sm:$0xff]
    %v67 = vld [vmem:[#allocation2 + $0x68] sm:$0xff]
    %v68 = vld [vmem:[#allocation2 + $0x70] sm:$0xff]
    %v69 = vld [vmem:[#allocation2 + $0x78] sm:$0xff]
    %v70 = vld [vmem:[#allocation5] sm:$0xff]
    %v71 = vld [vmem:[#allocation5 + $0x8] sm:$0xff]
    %v72 = vld [vmem:[#allocation5 + $0x10] sm:$0xff]
    %v73 = vld [vmem:[#allocation5 + $0x18] sm:$0xff]
    %v74 = vld [vmem:[#allocation5 + $0x20] sm:$0xff]
    %v75 = vld [vmem:[#allocation5 + $0x28] sm:$0xff]
    %v76 = vld [vmem:[#allocation5 + $0x30] sm:$0xff]
    %v77 = vld [vmem:[#allocation5 + $0x38] sm:$0xff]
    %v78 = vld [vmem:[#allocation5 + $0x40] sm:$0xff]
    %v79 = vld [vmem:[#allocation5 + $0x48] sm:$0xff]
    %v80 = vld [vmem:[#allocation5 + $0x50] sm:$0xff]
    %v81 = vld [vmem:[#allocation5 + $0x58] sm:$0xff]
    %v82 = vld [vmem:[#allocation5 + $0x60] sm:$0xff]
    %v83 = vld [vmem:[#allocation5 + $0x68] sm:$0xff]
    %v84 = vld [vmem:[#allocation5 + $0x70] sm:$0xff]
    %v85 = vld [vmem:[#allocation5 + $0x78] sm:$0xff]
    %v86 = vld [vmem:[#allocation5 + $0x80] sm:$0xff]
    %v87 = vld [vmem:[#allocation5 + $0x88] sm:$0xff]
    %v88 = vld [vmem:[#allocation5 + $0x90] sm:$0xff]
    %v89 = vld [vmem:[#allocation5 + $0x98] sm:$0xff]
    %v90 = vld [vmem:[#allocation5 + $0xa0] sm:$0xff]
    %v91 = vld [vmem:[#allocation5 + $0xa8] sm:$0xff]
    %v92 = vld [vmem:[#allocation5 + $0xb0] sm:$0xff]
    %v93 = vld [vmem:[#allocation5 + $0xb8] sm:$0xff]
    %v94 = vld [vmem:[#allocation5 + $0xc0] sm:$0xff]
    %v95 = vld [vmem:[#allocation5 + $0xc8] sm:$0xff]
    %v96 = vld [vmem:[#allocation5 + $0xd0] sm:$0xff]
    %v97 = vld [vmem:[#allocation5 + $0xd8] sm:$0xff]
    %v98 = vld [vmem:[#allocation5 + $0xe0] sm:$0xff]
    %v99 = vld [vmem:[#allocation5 + $0xe8] sm:$0xff]
    %v100 = vld [vmem:[#allocation5 + $0xf0] sm:$0xff]
    %v101 = vld [vmem:[#allocation5 + $0xf8] sm:$0xff]
    %v102 = vld [vmem:[#allocation5 + $0x100] sm:$0xff]
    %v103 = vld [vmem:[#allocation5 + $0x108] sm:$0xff]
    %v104 = vld [vmem:[#allocation5 + $0x110] sm:$0xff]
    %v105 = vld [vmem:[#allocation5 + $0x118] sm:$0xff]
    %v106 = vld [vmem:[#allocation5 + $0x120] sm:$0xff]
    %v107 = vld [vmem:[#allocation5 + $0x128] sm:$0xff]
    %v108 = vld [vmem:[#allocation5 + $0x130] sm:$0xff]
    %v109 = vld [vmem:[#allocation5 + $0x138] sm:$0xff]
    %v110 = vld [vmem:[#allocation5 + $0x140] sm:$0xff]
    %v111 = vld [vmem:[#allocation5 + $0x148] sm:$0xff]
    %v112 = vld [vmem:[#allocation5 + $0x150] sm:$0xff]
    %v113 = vld [vmem:[#allocation5 + $0x158] sm:$0xff]
    %v114 = vld [vmem:[#allocation5 + $0x160] sm:$0xff]
    %v115 = vld [vmem:[#allocation5 + $0x168] sm:$0xff]
    %v116 = vld [vmem:[#allocation5 + $0x170] sm:$0xff]
    %v117 = vld [vmem:[#allocation5 + $0x178] sm:$0xff]
    %v118 = vld [vmem:[#allocation5 + $0x180] sm:$0xff]
    %v119 = vld [vmem:[#allocation5 + $0x188] sm:$0xff]
    %v120 = vld [vmem:[#allocation5 + $0x190] sm:$0xff]
    %v121 = vld [vmem:[#allocation5 + $0x198] sm:$0xff]
    %v122 = vld [vmem:[#allocation5 + $0x1a0] sm:$0xff]
    %v123 = vld [vmem:[#allocation5 + $0x1a8] sm:$0xff]
    %v124 = vld [vmem:[#allocation5 + $0x1b0] sm:$0xff]
    %v125 = vld [vmem:[#allocation5 + $0x1b8] sm:$0xff]
    %v126 = vld [vmem:[#allocation5 + $0x1c0] sm:$0xff]
    %v127 = vld [vmem:[#allocation5 + $0x1c8] sm:$0xff]
    %v128 = vld [vmem:[#allocation5 + $0x1d0] sm:$0xff]
    %v129 = vld [vmem:[#allocation5 + $0x1d8] sm:$0xff]
    %v130 = vld [vmem:[#allocation5 + $0x1e0] sm:$0xff]
    %v131 = vld [vmem:[#allocation5 + $0x1e8] sm:$0xff]
    %v132 = vld [vmem:[#allocation5 + $0x1f0] sm:$0xff]
    %v133 = vld [vmem:[#allocation5 + $0x1f8] sm:$0xff]
    %v134 = vld [vmem:[#allocation7] sm:$0xf]
    %v136 = vlaneseq
    %v137 = vshrl.u32 %v136, 7
    %v138 = vsub.s32 0, %v137
    %v139 = vrot.slane %v134, %v138
    %v140 = vlaneseq
    %v141 = vshrl.u32 %v140, 7
    %v142 = vsub.s32 1, %v141
    %v143 = vrot.slane %v134, %v142
    %v144 = vlaneseq
    %v145 = vshrl.u32 %v144, 7
    %v146 = vsub.s32 2, %v145
    %v147 = vrot.slane %v134, %v146
    %v148 = vlaneseq
    %v149 = vshrl.u32 %v148, 7
    %v150 = vsub.s32 3, %v149
    %v151 = vrot.slane %v134, %v150
    %156 = vmatprep.subr.mxu0 %v131
    %157 = vmatpush1.msra.mxu0 %v130
    %158 = vmatprep.subr.mxu0 %v127
    %159 = vmatpush1.msra.mxu0 %v126
    %160 = vmatprep.subr.mxu0 %v123
    %161 = vmatpush1.msra.mxu0 %v122
    %162 = vmatprep.subr.mxu0 %v119
    %163 = vmatpush1.msra.mxu0 %v118
    %164 = vmatprep.subr.mxu0 %v115
    %165 = vmatpush1.msra.mxu0 %v114
    %166 = vmatprep.subr.mxu0 %v111
    %167 = vmatpush1.msra.mxu0 %v110
    %168 = vmatprep.subr.mxu0 %v107
    %169 = vmatpush1.msra.mxu0 %v106
    %170 = vmatprep.subr.mxu0 %v103
    %171 = vmatpush1.msra.mxu0 %v102
    %172 = vmatprep.subr.mxu0 %v99
    %173 = vmatpush1.msra.mxu0 %v98
    %174 = vmatprep.subr.mxu0 %v95
    %175 = vmatpush1.msra.mxu0 %v94
    %176 = vmatprep.subr.mxu0 %v91
    %177 = vmatpush1.msra.mxu0 %v90
    %178 = vmatprep.subr.mxu0 %v87
    %179 = vmatpush1.msra.mxu0 %v86
    %180 = vmatprep.subr.mxu0 %v83
    %181 = vmatpush1.msra.mxu0 %v82
    %182 = vmatprep.subr.mxu0 %v79
    %183 = vmatpush1.msra.mxu0 %v78
    %184 = vmatprep.subr.mxu0 %v75
    %185 = vmatpush1.msra.mxu0 %v74
    %186 = vmatprep.subr.mxu0 %v71
    %187 = vmatpush1.msra.mxu0 %v70
    %188 = vmatprep.subr.mxu0 0.0
    %189 = vmatpush2.msra.mxu0 0.0
    %190 = vmatprep.subr.mxu0 0.0
    %191 = vmatpush2.msra.mxu0 0.0
    %192 = vmatprep.subr.mxu0 0.0
    %193 = vmatpush2.msra.mxu0 0.0
    %194 = vmatprep.subr.mxu0 0.0
    %195 = vmatpush2.msra.mxu0 0.0
    %196 = vmatprep.subr.mxu0 0.0
    %197 = vmatpush2.msra.mxu0 0.0
    %198 = vmatprep.subr.mxu0 0.0
    %199 = vmatpush2.msra.mxu0 0.0
    %200 = vmatprep.subr.mxu0 0.0
    %201 = vmatpush2.msra.mxu0 0.0
    %202 = vmatprep.subr.mxu0 0.0
    %203 = vmatpush2.msra.mxu0 0.0
    %204 = vmatprep.subr.mxu0 0.0
    %205 = vmatpush2.msra.mxu0 0.0
    %206 = vmatprep.subr.mxu0 0.0
    %207 = vmatpush2.msra.mxu0 0.0
    %208 = vmatprep.subr.mxu0 0.0
    %209 = vmatpush2.msra.mxu0 0.0
    %210 = vmatprep.subr.mxu0 0.0
    %211 = vmatpush2.msra.mxu0 0.0
    %212 = vmatprep.subr.mxu0 0.0
    %213 = vmatpush2.msra.mxu0 0.0
    %214 = vmatprep.subr.mxu0 0.0
    %215 = vmatpush2.msra.mxu0 0.0
    %216 = vmatprep.subr.mxu0 0.0
    %217 = vmatpush2.msra.mxu0 0.0
    %218 = vmatprep.subr.mxu0 0.0
    %219 = vmatpush2.msra.mxu0 0.0
    %220 = vmatprep.mubr.f32.mxu0 0.0
    %221 = vmatmul.mubr.f32.gmra.mxu0 %v54
    %v222 = vpop.f32.mrf.mxu0
    %v223 = vadd.f32 %v139, %v222
    %v224 = vpop.f32.mrf.mxu0
    %v225 = vadd.f32 %v143, %v224
    %226 = vmatprep.mubr.f32.mxu0 0.0
    %227 = vmatmul.mubr.f32.gmra.mxu0 %v55
    %v228 = vpop.f32.mrf.mxu0
    %v229 = vadd.f32 %v139, %v228
    %v230 = vpop.f32.mrf.mxu0
    %v231 = vadd.f32 %v143, %v230
    %232 = vmatprep.mubr.f32.mxu0 0.0
    %233 = vmatmul.mubr.f32.gmra.mxu0 %v56
    %v234 = vpop.f32.mrf.mxu0
    %v235 = vadd.f32 %v139, %v234
    %v236 = vpop.f32.mrf.mxu0
    %v237 = vadd.f32 %v143, %v236
    %238 = vmatprep.mubr.f32.mxu0 0.0
    %239 = vmatmul.mubr.f32.gmra.mxu0 %v57
    %v240 = vpop.f32.mrf.mxu0
    %v241 = vadd.f32 %v139, %v240
    %v242 = vpop.f32.mrf.mxu0
    %v243 = vadd.f32 %v143, %v242
    %244 = vmatprep.mubr.f32.mxu0 0.0
    %245 = vmatmul.mubr.f32.gmra.mxu0 %v58
    %v246 = vpop.f32.mrf.mxu0
    %v247 = vadd.f32 %v139, %v246
    %v248 = vpop.f32.mrf.mxu0
    %v249 = vadd.f32 %v143, %v248
    %250 = vmatprep.mubr.f32.mxu0 0.0
    %251 = vmatmul.mubr.f32.gmra.mxu0 %v59
    %v252 = vpop.f32.mrf.mxu0
    %v253 = vadd.f32 %v139, %v252
    %v254 = vpop.f32.mrf.mxu0
    %v255 = vadd.f32 %v143, %v254
    %256 = vmatprep.mubr.f32.mxu0 0.0
    %257 = vmatmul.mubr.f32.gmra.mxu0 %v60
    %v258 = vpop.f32.mrf.mxu0
    %v259 = vadd.f32 %v139, %v258
    %v260 = vpop.f32.mrf.mxu0
    %v261 = vadd.f32 %v143, %v260
    %262 = vmatprep.mubr.f32.mxu0 0.0
    %263 = vmatmul.mubr.f32.gmra.mxu0 %v61
    %v264 = vpop.f32.mrf.mxu0
    %v265 = vadd.f32 %v139, %v264
    %v266 = vpop.f32.mrf.mxu0
    %v267 = vadd.f32 %v143, %v266
    %268 = vmatprep.mubr.f32.mxu0 0.0
    %269 = vmatmul.mubr.f32.gmra.mxu0 %v62
    %v270 = vpop.f32.mrf.mxu0
    %v271 = vadd.f32 %v139, %v270
    %v272 = vpop.f32.mrf.mxu0
    %v273 = vadd.f32 %v143, %v272
    %274 = vmatprep.mubr.f32.mxu0 0.0
    %275 = vmatmul.mubr.f32.gmra.mxu0 %v63
    %v276 = vpop.f32.mrf.mxu0
    %v277 = vadd.f32 %v139, %v276
    %v278 = vpop.f32.mrf.mxu0
    %v279 = vadd.f32 %v143, %v278
    %280 = vmatprep.mubr.f32.mxu0 0.0
    %281 = vmatmul.mubr.f32.gmra.mxu0 %v64
    %v282 = vpop.f32.mrf.mxu0
    %v283 = vadd.f32 %v139, %v282
    %v284 = vpop.f32.mrf.mxu0
    %v285 = vadd.f32 %v143, %v284
    %286 = vmatprep.mubr.f32.mxu0 0.0
    %287 = vmatmul.mubr.f32.gmra.mxu0 %v65
    %v288 = vpop.f32.mrf.mxu0
    %v289 = vadd.f32 %v139, %v288
    %v290 = vpop.f32.mrf.mxu0
    %v291 = vadd.f32 %v143, %v290
    %292 = vmatprep.mubr.f32.mxu0 0.0
    %293 = vmatmul.mubr.f32.gmra.mxu0 %v66
    %v294 = vpop.f32.mrf.mxu0
    %v295 = vadd.f32 %v139, %v294
    %v296 = vpop.f32.mrf.mxu0
    %v297 = vadd.f32 %v143, %v296
    %298 = vmatprep.mubr.f32.mxu0 0.0
    %299 = vmatmul.mubr.f32.gmra.mxu0 %v67
    %v300 = vpop.f32.mrf.mxu0
    %v301 = vadd.f32 %v139, %v300
    %v302 = vpop.f32.mrf.mxu0
    %v303 = vadd.f32 %v143, %v302
    %304 = vmatprep.mubr.f32.mxu0 0.0
    %305 = vmatmul.mubr.f32.gmra.mxu0 %v68
    %v306 = vpop.f32.mrf.mxu0
    %v307 = vadd.f32 %v139, %v306
    %v308 = vpop.f32.mrf.mxu0
    %v309 = vadd.f32 %v143, %v308
    %310 = vmatprep.mubr.f32.mxu0 0.0
    %311 = vmatmul.mubr.f32.gmra.mxu0 %v69
    %v312 = vpop.f32.mrf.mxu0
    %v313 = vadd.f32 %v139, %v312
    %v314 = vpop.f32.mrf.mxu0
    %v315 = vadd.f32 %v143, %v314
    %316 = vdwg.mxu0
    %317 = vmatprep.subr.mxu0 %v133
    %318 = vmatpush1.msra.mxu0 %v132
    %319 = vmatprep.subr.mxu0 %v129
    %320 = vmatpush1.msra.mxu0 %v128
    %321 = vmatprep.subr.mxu0 %v125
    %322 = vmatpush1.msra.mxu0 %v124
    %323 = vmatprep.subr.mxu0 %v121
    %324 = vmatpush1.msra.mxu0 %v120
    %325 = vmatprep.subr.mxu0 %v117
    %326 = vmatpush1.msra.mxu0 %v116
    %327 = vmatprep.subr.mxu0 %v113
    %328 = vmatpush1.msra.mxu0 %v112
    %329 = vmatprep.subr.mxu0 %v109
    %330 = vmatpush1.msra.mxu0 %v108
    %331 = vmatprep.subr.mxu0 %v105
    %332 = vmatpush1.msra.mxu0 %v104
    %333 = vmatprep.subr.mxu0 %v101
    %334 = vmatpush1.msra.mxu0 %v100
    %335 = vmatprep.subr.mxu0 %v97
    %336 = vmatpush1.msra.mxu0 %v96
    %337 = vmatprep.subr.mxu0 %v93
    %338 = vmatpush1.msra.mxu0 %v92
    %339 = vmatprep.subr.mxu0 %v89
    %340 = vmatpush1.msra.mxu0 %v88
    %341 = vmatprep.subr.mxu0 %v85
    %342 = vmatpush1.msra.mxu0 %v84
    %343 = vmatprep.subr.mxu0 %v81
    %344 = vmatpush1.msra.mxu0 %v80
    %345 = vmatprep.subr.mxu0 %v77
    %346 = vmatpush1.msra.mxu0 %v76
    %347 = vmatprep.subr.mxu0 %v73
    %348 = vmatpush1.msra.mxu0 %v72
    %349 = vmatprep.subr.mxu0 0.0
    %350 = vmatpush2.msra.mxu0 0.0
    %351 = vmatprep.subr.mxu0 0.0
    %352 = vmatpush2.msra.mxu0 0.0
    %353 = vmatprep.subr.mxu0 0.0
    %354 = vmatpush2.msra.mxu0 0.0
    %355 = vmatprep.subr.mxu0 0.0
    %356 = vmatpush2.msra.mxu0 0.0
    %357 = vmatprep.subr.mxu0 0.0
    %358 = vmatpush2.msra.mxu0 0.0
    %359 = vmatprep.subr.mxu0 0.0
    %360 = vmatpush2.msra.mxu0 0.0
    %361 = vmatprep.subr.mxu0 0.0
    %362 = vmatpush2.msra.mxu0 0.0
    %363 = vmatprep.subr.mxu0 0.0
    %364 = vmatpush2.msra.mxu0 0.0
    %365 = vmatprep.subr.mxu0 0.0
    %366 = vmatpush2.msra.mxu0 0.0
    %367 = vmatprep.subr.mxu0 0.0
    %368 = vmatpush2.msra.mxu0 0.0
    %369 = vmatprep.subr.mxu0 0.0
    %370 = vmatpush2.msra.mxu0 0.0
    %371 = vmatprep.subr.mxu0 0.0
    %372 = vmatpush2.msra.mxu0 0.0
    %373 = vmatprep.subr.mxu0 0.0
    %374 = vmatpush2.msra.mxu0 0.0
    %375 = vmatprep.subr.mxu0 0.0
    %376 = vmatpush2.msra.mxu0 0.0
    %377 = vmatprep.subr.mxu0 0.0
    %378 = vmatpush2.msra.mxu0 0.0
    %379 = vmatprep.subr.mxu0 0.0
    %380 = vmatpush2.msra.mxu0 0.0
    %381 = vmatprep.mubr.f32.mxu0 0.0
    %382 = vmatmul.mubr.f32.gmra.mxu0 %v54
    %v383 = vpop.f32.mrf.mxu0
    %v384 = vadd.f32 %v147, %v383
    %v385 = vpop.f32.mrf.mxu0
    %v386 = vadd.f32 %v151, %v385
    %387 = vmatprep.mubr.f32.mxu0 0.0
    %388 = vmatmul.mubr.f32.gmra.mxu0 %v55
    %v389 = vpop.f32.mrf.mxu0
    %v390 = vadd.f32 %v147, %v389
    %v391 = vpop.f32.mrf.mxu0
    %v392 = vadd.f32 %v151, %v391
    %393 = vmatprep.mubr.f32.mxu0 0.0
    %394 = vmatmul.mubr.f32.gmra.mxu0 %v56
    %v395 = vpop.f32.mrf.mxu0
    %v396 = vadd.f32 %v147, %v395
    %v397 = vpop.f32.mrf.mxu0
    %v398 = vadd.f32 %v151, %v397
    %399 = vmatprep.mubr.f32.mxu0 0.0
    %400 = vmatmul.mubr.f32.gmra.mxu0 %v57
    %v401 = vpop.f32.mrf.mxu0
    %v402 = vadd.f32 %v147, %v401
    %v403 = vpop.f32.mrf.mxu0
    %v404 = vadd.f32 %v151, %v403
    %405 = vmatprep.mubr.f32.mxu0 0.0
    %406 = vmatmul.mubr.f32.gmra.mxu0 %v58
    %v407 = vpop.f32.mrf.mxu0
    %v408 = vadd.f32 %v147, %v407
    %v409 = vpop.f32.mrf.mxu0
    %v410 = vadd.f32 %v151, %v409
    %411 = vmatprep.mubr.f32.mxu0 0.0
    %412 = vmatmul.mubr.f32.gmra.mxu0 %v59
    %v413 = vpop.f32.mrf.mxu0
    %v414 = vadd.f32 %v147, %v413
    %v415 = vpop.f32.mrf.mxu0
    %v416 = vadd.f32 %v151, %v415
    %417 = vmatprep.mubr.f32.mxu0 0.0
    %418 = vmatmul.mubr.f32.gmra.mxu0 %v60
    %v419 = vpop.f32.mrf.mxu0
    %v420 = vadd.f32 %v147, %v419
    %v421 = vpop.f32.mrf.mxu0
    %v422 = vadd.f32 %v151, %v421
    %423 = vmatprep.mubr.f32.mxu0 0.0
    %424 = vmatmul.mubr.f32.gmra.mxu0 %v61
    %v425 = vpop.f32.mrf.mxu0
    %v426 = vadd.f32 %v147, %v425
    %v427 = vpop.f32.mrf.mxu0
    %v428 = vadd.f32 %v151, %v427
    %429 = vmatprep.mubr.f32.mxu0 0.0
    %430 = vmatmul.mubr.f32.gmra.mxu0 %v62
    %v431 = vpop.f32.mrf.mxu0
    %v432 = vadd.f32 %v147, %v431
    %v433 = vpop.f32.mrf.mxu0
    %v434 = vadd.f32 %v151, %v433
    %435 = vmatprep.mubr.f32.mxu0 0.0
    %436 = vmatmul.mubr.f32.gmra.mxu0 %v63
    %v437 = vpop.f32.mrf.mxu0
    %v438 = vadd.f32 %v147, %v437
    %v439 = vpop.f32.mrf.mxu0
    %v440 = vadd.f32 %v151, %v439
    %441 = vmatprep.mubr.f32.mxu0 0.0
    %442 = vmatmul.mubr.f32.gmra.mxu0 %v64
    %v443 = vpop.f32.mrf.mxu0
    %v444 = vadd.f32 %v147, %v443
    %v445 = vpop.f32.mrf.mxu0
    %v446 = vadd.f32 %v151, %v445
    %447 = vmatprep.mubr.f32.mxu0 0.0
    %448 = vmatmul.mubr.f32.gmra.mxu0 %v65
    %v449 = vpop.f32.mrf.mxu0
    %v450 = vadd.f32 %v147, %v449
    %v451 = vpop.f32.mrf.mxu0
    %v452 = vadd.f32 %v151, %v451
    %453 = vmatprep.mubr.f32.mxu0 0.0
    %454 = vmatmul.mubr.f32.gmra.mxu0 %v66
    %v455 = vpop.f32.mrf.mxu0
    %v456 = vadd.f32 %v147, %v455
    %v457 = vpop.f32.mrf.mxu0
    %v458 = vadd.f32 %v151, %v457
    %459 = vmatprep.mubr.f32.mxu0 0.0
    %460 = vmatmul.mubr.f32.gmra.mxu0 %v67
    %v461 = vpop.f32.mrf.mxu0
    %v462 = vadd.f32 %v147, %v461
    %v463 = vpop.f32.mrf.mxu0
    %v464 = vadd.f32 %v151, %v463
    %465 = vmatprep.mubr.f32.mxu0 0.0
    %466 = vmatmul.mubr.f32.gmra.mxu0 %v68
    %v467 = vpop.f32.mrf.mxu0
    %v468 = vadd.f32 %v147, %v467
    %v469 = vpop.f32.mrf.mxu0
    %v470 = vadd.f32 %v151, %v469
    %471 = vmatprep.mubr.f32.mxu0 0.0
    %472 = vmatmul.mubr.f32.gmra.mxu0 %v69
    %v473 = vpop.f32.mrf.mxu0
    %v474 = vadd.f32 %v147, %v473
    %v475 = vpop.f32.mrf.mxu0
    %v476 = vadd.f32 %v151, %v475
    %477 = vdwg.mxu0
    %478 = vst [vmem:[#allocation8] sm:$0xff] %v223
    %479 = vst [vmem:[#allocation8 + $0x8] sm:$0xff] %v225
    %480 = vst [vmem:[#allocation8 + $0x10] sm:$0xff] %v384
    %481 = vst [vmem:[#allocation8 + $0x18] sm:$0xff] %v386
    %482 = vst [vmem:[#allocation8 + $0x20] sm:$0xff] %v229
    %483 = vst [vmem:[#allocation8 + $0x28] sm:$0xff] %v231
    %484 = vst [vmem:[#allocation8 + $0x30] sm:$0xff] %v390
    %485 = vst [vmem:[#allocation8 + $0x38] sm:$0xff] %v392
    %486 = vst [vmem:[#allocation8 + $0x40] sm:$0xff] %v235
    %487 = vst [vmem:[#allocation8 + $0x48] sm:$0xff] %v237
    %488 = vst [vmem:[#allocation8 + $0x50] sm:$0xff] %v396
    %489 = vst [vmem:[#allocation8 + $0x58] sm:$0xff] %v398
    %490 = vst [vmem:[#allocation8 + $0x60] sm:$0xff] %v241
    %491 = vst [vmem:[#allocation8 + $0x68] sm:$0xff] %v243
    %492 = vst [vmem:[#allocation8 + $0x70] sm:$0xff] %v402
    %493 = vst [vmem:[#allocation8 + $0x78] sm:$0xff] %v404
    %494 = vst [vmem:[#allocation8 + $0x80] sm:$0xff] %v247
    %495 = vst [vmem:[#allocation8 + $0x88] sm:$0xff] %v249
    %496 = vst [vmem:[#allocation8 + $0x90] sm:$0xff] %v408
    %497 = vst [vmem:[#allocation8 + $0x98] sm:$0xff] %v410
    %498 = vst [vmem:[#allocation8 + $0xa0] sm:$0xff] %v253
    %499 = vst [vmem:[#allocation8 + $0xa8] sm:$0xff] %v255
    %500 = vst [vmem:[#allocation8 + $0xb0] sm:$0xff] %v414
    %501 = vst [vmem:[#allocation8 + $0xb8] sm:$0xff] %v416
    %502 = vst [vmem:[#allocation8 + $0xc0] sm:$0xff] %v259
    %503 = vst [vmem:[#allocation8 + $0xc8] sm:$0xff] %v261
    %504 = vst [vmem:[#allocation8 + $0xd0] sm:$0xff] %v420
    %505 = vst [vmem:[#allocation8 + $0xd8] sm:$0xff] %v422
    %506 = vst [vmem:[#allocation8 + $0xe0] sm:$0xff] %v265
    %507 = vst [vmem:[#allocation8 + $0xe8] sm:$0xff] %v267
    %508 = vst [vmem:[#allocation8 + $0xf0] sm:$0xff] %v426
    %509 = vst [vmem:[#allocation8 + $0xf8] sm:$0xff] %v428
    %510 = vst [vmem:[#allocation8 + $0x100] sm:$0xff] %v271
    %511 = vst [vmem:[#allocation8 + $0x108] sm:$0xff] %v273
    %512 = vst [vmem:[#allocation8 + $0x110] sm:$0xff] %v432
    %513 = vst [vmem:[#allocation8 + $0x118] sm:$0xff] %v434
    %514 = vst [vmem:[#allocation8 + $0x120] sm:$0xff] %v277
    %515 = vst [vmem:[#allocation8 + $0x128] sm:$0xff] %v279
    %516 = vst [vmem:[#allocation8 + $0x130] sm:$0xff] %v438
    %517 = vst [vmem:[#allocation8 + $0x138] sm:$0xff] %v440
    %518 = vst [vmem:[#allocation8 + $0x140] sm:$0xff] %v283
    %519 = vst [vmem:[#allocation8 + $0x148] sm:$0xff] %v285
    %520 = vst [vmem:[#allocation8 + $0x150] sm:$0xff] %v444
    %521 = vst [vmem:[#allocation8 + $0x158] sm:$0xff] %v446
    %522 = vst [vmem:[#allocation8 + $0x160] sm:$0xff] %v289
    %523 = vst [vmem:[#allocation8 + $0x168] sm:$0xff] %v291
    %524 = vst [vmem:[#allocation8 + $0x170] sm:$0xff] %v450
    %525 = vst [vmem:[#allocation8 + $0x178] sm:$0xff] %v452
    %526 = vst [vmem:[#allocation8 + $0x180] sm:$0xff] %v295
    %527 = vst [vmem:[#allocation8 + $0x188] sm:$0xff] %v297
    %528 = vst [vmem:[#allocation8 + $0x190] sm:$0xff] %v456
    %529 = vst [vmem:[#allocation8 + $0x198] sm:$0xff] %v458
    %530 = vst [vmem:[#allocation8 + $0x1a0] sm:$0xff] %v301
    %531 = vst [vmem:[#allocation8 + $0x1a8] sm:$0xff] %v303
    %532 = vst [vmem:[#allocation8 + $0x1b0] sm:$0xff] %v462
    %533 = vst [vmem:[#allocation8 + $0x1b8] sm:$0xff] %v464
    %534 = vst [vmem:[#allocation8 + $0x1c0] sm:$0xff] %v307
    %535 = vst [vmem:[#allocation8 + $0x1c8] sm:$0xff] %v309
    %536 = vst [vmem:[#allocation8 + $0x1d0] sm:$0xff] %v468
    %537 = vst [vmem:[#allocation8 + $0x1d8] sm:$0xff] %v470
    %538 = vst [vmem:[#allocation8 + $0x1e0] sm:$0xff] %v313
    %539 = vst [vmem:[#allocation8 + $0x1e8] sm:$0xff] %v315
    %540 = vst [vmem:[#allocation8 + $0x1f0] sm:$0xff] %v474
    %541 = vst [vmem:[#allocation8 + $0x1f8] sm:$0xff] %v476
    // Predicated region
    $region26: #{tpu_custom_call.1} parent=1 // pred_check
      _
    $region27: #{tpu_custom_call.1} parent=1 // pred_check_branch
      %543 = sbr.rel (0) target = $region29
    $region28: #{tpu_custom_call.1} parent=1 // pred_region
      %s545 = ssub.s32 8192, 8192
      %546 = vsyncadd [#allocation4], %s545
      %s547 = sshll.u32 [#allocation8], 4
      %s548 = int_to_ptr.vmem [resolvable:$true] %s547
      %553 = dma.vmem_to_hbm [thread:$0]  %s548, 8192, %s3, [#allocation4], 512, 512, 32
    $region29: #{tpu_custom_call.1} parent=1 // pred_fallthru
      _
    // Predicated region
    $region30: #{tpu_custom_call.1} parent=1 // pred_check
      _
    $region31: #{tpu_custom_call.1} parent=1 // pred_check_branch
      %555 = sbr.rel (0) target = $region33
    $region32: #{tpu_custom_call.1} parent=1 // pred_region
      %556 = dma.done [#allocation4], 8192
    $region33: #{tpu_custom_call.1} parent=1 // pred_fallthru
      _
    %557 = vsyncpa [#allocation3], 1
    %558 = vsyncpa [#allocation6], 1
    %559 = vsyncpa [#allocation4], 1

</llo_original>
